<compile_context>
chip_gen: v7x
topology: tpu7x:2x2x1
jax: 0.10.0
libtpu: 0.0.40
codegen_flags: <defaults>
</compile_context>

<pallas_src>
import jax
import jax.numpy as jnp
from jax.experimental import pallas as pl
from jax.experimental.pallas import tpu as pltpu


def _round_up(x: int, m: int) -> int:
    return ((x + m - 1) // m) * m


def _vmem_capacity_bytes() -> int:
    """Per-TensorCore VMEM capacity; conservative 64 MiB (v7x) fallback."""
    try:
        cap = int(pltpu.get_tpu_info().vmem_capacity_bytes)
        if cap > 0:
            return cap
    except Exception:
        pass
    return 64 << 20


def _pick_tm(m: int, tm_limit: int) -> int:
    """Row tile: multiple of 8 (or == M), capped so grid_m >= 2 when M allows
    (spans both v7x TensorCores; harmless / mildly helpful on 1-TC chips)."""
    tm = max(8, int(tm_limit))
    if m >= 16:
        tm = min(tm, _round_up((m + 1) // 2, 8))
    if tm >= m:
        return m                       # single block == full row extent (always legal)
    return max(8, (tm // 8) * 8)


# ----------------------------- kernels ---------------------------------------

def _fused_kernel(x_ref, w_ref, b_ref, o_ref):
    # x_ref: [TM, K], w_ref: [K, P_pad] (pre-transposed), b_ref: [1, P_pad],
    # o_ref: [TM, P_pad].  MXU-native contraction with fp32 accumulation.
    acc = jnp.dot(x_ref[...], w_ref[...], preferred_element_type=jnp.float32)
    o_ref[...] = (acc + b_ref[...].astype(jnp.float32)).astype(o_ref.dtype)


def _ktiled_kernel(x_ref, w_ref, b_ref, o_ref, acc_ref):
    # Same contraction with K streamed in tiles and an fp32 VMEM accumulator.
    k = pl.program_id(1)

    @pl.when(k == 0)
    def _():
        acc_ref[...] = jnp.zeros_like(acc_ref)

    acc_ref[...] += jnp.dot(x_ref[...], w_ref[...],
                            preferred_element_type=jnp.float32)

    @pl.when(k == pl.num_programs(1) - 1)
    def _():
        o_ref[...] = (acc_ref[...] + b_ref[...].astype(jnp.float32)).astype(o_ref.dtype)


# ----------------------------- wrapper ----------------------------------------

def flatten_head_forward(x, weight, bias, *, tm_target: int = 1024,
                         use_bf16_inputs: bool = False, k_tile=None):
    """FlattenHead forward (eval mode).

    x: [B, F, S, D]; weight: [P, S*D] (PyTorch nn.Linear layout); bias: [P].
    Returns [B, P, F].  Dropout is identity (eval mode).
    `k_tile` forces the K-tiled fallback path with the given K tile size.
    """
    B, F, S, D = x.shape
    P = weight.shape[0]
    K = S * D
    M = B * F

    out_dtype = x.dtype
    stream_dtype = jnp.bfloat16 if use_bf16_inputs else x.dtype
    isz_x = jnp.dtype(stream_dtype).itemsize
    isz_w = isz_x
    out_isz = jnp.dtype(out_dtype).itemsize

    # Lane-dense output: pad P to a multiple of 128 (unmasked vector stores).
    P_pad = _round_up(P, 128)

    # ---- wrapper-side layout prep (one-time, cheap relative to the GEMM) -----
    x2d = x.reshape(M, K)                        # contiguous reshape, no copy pass
    wT = weight.T                                # one-time transpose -> [K, P]
    b2d = bias.reshape(1, P).astype(jnp.float32)
    if P_pad != P:
        wT = jnp.pad(wT, ((0, 0), (0, P_pad - P)))
        b2d = jnp.pad(b2d, ((0, 0), (0, P_pad - P)))
    if use_bf16_inputs:
        # Only a net win if upstream tensors are already bf16 / the cast fuses.
        x2d = x2d.astype(stream_dtype)
        wT = wT.astype(stream_dtype)

    # ---- generation-aware VMEM budget -----------------------------------------
    budget = int(_vmem_capacity_bytes() * 0.85)  # ~15% headroom for Mosaic scratch
    headroom = 4 << 20

    w_bytes = K * P_pad * isz_w
    pinned_bytes = 2 * (w_bytes + P_pad * 4)     # conservatively double-buffered
    per_row = 2 * K * isz_x + 2 * P_pad * out_isz
    tm_cap = (budget - headroom - pinned_bytes) // per_row

    use_k_tiling = (k_tile is not None) or (tm_cap < min(64, _round_up(M, 8)))

    if not use_k_tiling:
        # ----------------------- resident-weight path --------------------------
        tm = _pick_tm(M, min(tm_target, int(tm_cap)))
        grid_m = pl.cdiv(M, tm)

        vmem_needed = (2 * tm * K * isz_x + pinned_bytes
                       + 2 * tm * P_pad * out_isz + headroom)
        vmem_limit = int(min(budget, max(vmem_needed, 32 << 20)))

        cost = pl.CostEstimate(
            flops=2 * M * K * P_pad,
            transcendentals=0,
            bytes_accessed=isz_x * M * K + isz_w * K * P_pad + out_isz * M * P_pad,
        )

        def _launch(single_buffer_pinned: bool):
            if single_buffer_pinned:
                # Pinned (index_map == (0,0) for all steps) blocks need only one buffer.
                w_spec = pl.BlockSpec((K, P_pad), lambda i: (0, 0),
                                      pipeline_mode=pl.Buffered(1))
                b_spec = pl.BlockSpec((1, P_pad), lambda i: (0, 0),
                                      pipeline_mode=pl.Buffered(1))
            else:
                w_spec = pl.BlockSpec((K, P_pad), lambda i: (0, 0))
                b_spec = pl.BlockSpec((1, P_pad), lambda i: (0, 0))
            return pl.pallas_call(
                _fused_kernel,
                out_shape=jax.ShapeDtypeStruct((M, P_pad), out_dtype),
                grid_spec=pltpu.PrefetchScalarGridSpec(
                    num_scalar_prefetch=0,
                    grid=(grid_m,),
                    in_specs=[
                        pl.BlockSpec((tm, K), lambda i: (i, 0)),   # streamed x rows
                        w_spec,                                    # resident weight
                        b_spec,                                    # resident bias
                    ],
                    out_specs=pl.BlockSpec((tm, P_pad), lambda i: (i, 0)),
                ),
                compiler_params=pltpu.CompilerParams(
                    dimension_semantics=("parallel",),
                    vmem_limit_bytes=vmem_limit,
                ),
                cost_estimate=cost,
            )(x2d, wT, b2d)

        try:
            out2d = _launch(True)
        except Exception:
            # pipeline_mode=pl.Buffered(1) unsupported on this jax build:
            # fall back to default double-buffering (identical numerics).
            out2d = _launch(False)

    else:
        # --------------------------- K-tiled path -------------------------------
        tm = _pick_tm(M, min(256, tm_target))
        grid_m = pl.cdiv(M, tm)

        fixed = 2 * P_pad * 4 + tm * P_pad * 4 + 2 * tm * P_pad * out_isz + headroom
        per_k = 2 * (tm * isz_x + P_pad * isz_w)
        tk_cap = max(128, ((budget - fixed) // per_k) // 128 * 128)
        tk = min(tk_cap, _round_up(K, 128))
        if k_tile is not None:
            tk = min(tk, max(128, _round_up(int(k_tile), 128)))
        K_pad = _round_up(K, tk)
        grid_k = K_pad // tk

        # Zero-pad K so every K tile contributes exactly (zeros add nothing).
        if K_pad != K:
            x2d = jnp.pad(x2d, ((0, 0), (0, K_pad - K)))
            wT = jnp.pad(wT, ((0, K_pad - K), (0, 0)))

        vmem_needed = (2 * tm * tk * isz_x + 2 * tk * P_pad * isz_w
                       + 2 * P_pad * 4 + 2 * tm * P_pad * out_isz
                       + tm * P_pad * 4 + headroom)
        vmem_limit = int(min(budget, max(vmem_needed, 32 << 20)))

        cost = pl.CostEstimate(
            flops=2 * M * K_pad * P_pad,
            transcendentals=0,
            bytes_accessed=(isz_x * M * K_pad + isz_w * K_pad * P_pad
                            + out_isz * M * P_pad),
        )

        out2d = pl.pallas_call(
            _ktiled_kernel,
            out_shape=jax.ShapeDtypeStruct((M, P_pad), out_dtype),
            grid_spec=pltpu.PrefetchScalarGridSpec(
                num_scalar_prefetch=0,
                grid=(grid_m, grid_k),
                in_specs=[
                    pl.BlockSpec((tm, tk), lambda i, k: (i, k)),
                    pl.BlockSpec((tk, P_pad), lambda i, k: (k, 0)),
                    pl.BlockSpec((1, P_pad), lambda i, k: (0, 0)),
                ],
                out_specs=pl.BlockSpec((tm, P_pad), lambda i, k: (i, 0)),
                scratch_shapes=[pltpu.VMEM((tm, P_pad), jnp.float32)],
            ),
            compiler_params=pltpu.CompilerParams(
                dimension_semantics=("parallel", "arbitrary"),
                vmem_limit_bytes=vmem_limit,
            ),
            cost_estimate=cost,
        )(x2d, wT, b2d)

    # [M, P_pad] -> [M, P] -> [B, F, P] -> [B, P, F] (slice+transpose fuse in XLA).
    out = out2d[:, :P].reshape(B, F, P).transpose(0, 2, 1)
    # TODO(synk): train-mode stochastic dropout not implemented (eval-mode identity).
    return out


def flatten_head_reference(x, weight, bias):
    B, F, S, D = x.shape
    y = jnp.einsum("bfk,pk->bfp", x.reshape(B, F, S * D), weight) + bias
    return y.transpose(0, 2, 1)


if __name__ == "__main__":
    # Small shapes consistent with the module.
    B, F, S, D = 2, 4, 8, 32     # batch, num_features, seq_len, d_model
    P = 16                       # pred_len
    K = S * D

    key = jax.random.PRNGKey(0)
    kx, kw, kb = jax.random.split(key, 3)

    x = jax.random.normal(kx, (B, F, S, D), dtype=jnp.float32)

    # Deterministic init mimicking nn.Linear: U(-1/sqrt(fan_in), 1/sqrt(fan_in))
    bound = 1.0 / (K ** 0.5)
    weight = jax.random.uniform(kw, (P, K), jnp.float32, -bound, bound)
    bias = jax.random.uniform(kb, (P,), jnp.float32, -bound, bound)

    ref = flatten_head_reference(x, weight, bias)

    # Default (resident-weight) path.
    out = jax.block_until_ready(flatten_head_forward(x, weight, bias))
    assert out.shape == (B, P, F), out.shape
    assert jnp.allclose(out, ref, atol=1e-5, rtol=1e-5), "mismatch vs reference"

    # Exercise the K-tiling fallback path (used automatically for large S*D).
    out_kt = jax.block_until_ready(flatten_head_forward(x, weight, bias, k_tile=128))
    assert out_kt.shape == (B, P, F), out_kt.shape
    assert jnp.allclose(out_kt, ref, atol=1e-5, rtol=1e-5), "k-tiled mismatch vs reference"

    print("KERNEL_OK")
</pallas_src>

<mosaic_0001>
module attributes {stable_mosaic.version = 11 : i64} {
  func.func @_fused_kernel(%arg0: i32, %arg1: memref<8x256xf32, #tpu.memory_space<vmem>>, %arg2: memref<256x128xf32, #tpu.memory_space<vmem>>, %arg3: memref<1x128xf32, #tpu.memory_space<vmem>>, %arg4: memref<8x128xf32, #tpu.memory_space<vmem>>) attributes {dimension_semantics = [#tpu.dimension_semantics<parallel>], iteration_bounds = array<i64: 1>, scalar_prefetch = 0 : i64, scratch_operands = 0 : i64, tpu.core_type = #tpu.core_type<tc>, window_params = [{transform_indices = @transform_0, window_bounds = array<i64: 8, 256>}, {pipeline_mode = #tpu.pipeline_mode<synchronous>, transform_indices = @transform_1, window_bounds = array<i64: 256, 128>}, {pipeline_mode = #tpu.pipeline_mode<synchronous>, transform_indices = @transform_2, window_bounds = array<i64: 1, 128>}, {transform_indices = @transform_3, window_bounds = array<i64: 8, 128>}]} {
    %c0 = arith.constant 0 : index
    %c0_0 = arith.constant 0 : index
    %0 = vector.load %arg1[%c0, %c0_0] : memref<8x256xf32, #tpu.memory_space<vmem>>, vector<8x256xf32>
    %c0_1 = arith.constant 0 : index
    %c0_2 = arith.constant 0 : index
    %1 = vector.load %arg2[%c0_1, %c0_2] : memref<256x128xf32, #tpu.memory_space<vmem>>, vector<256x128xf32>
    %cst = arith.constant dense<0.000000e+00> : vector<8x128xf32>
    %2 = tpu.matmul %0, %1, %cst {dimension_numbers = #tpu.dot_dimension_numbers<[1], [0], [0], [1], [0, 0, 1, 1], [], []>} : vector<8x256xf32>, vector<256x128xf32>, vector<8x128xf32> -> vector<8x128xf32>
    %c0_3 = arith.constant 0 : index
    %c0_4 = arith.constant 0 : index
    %3 = vector.load %arg3[%c0_3, %c0_4] : memref<1x128xf32, #tpu.memory_space<vmem>>, vector<1x128xf32>
    %4 = vector.broadcast %3 : vector<1x128xf32> to vector<8x128xf32>
    %5 = arith.addf %2, %4 : vector<8x128xf32>
    %c0_5 = arith.constant 0 : index
    %c0_6 = arith.constant 0 : index
    %6 = vector.load %arg4[%c0_5, %c0_6] : memref<8x128xf32, #tpu.memory_space<vmem>>, vector<8x128xf32>
    tpu.vector_store %arg4[%c0_5, %c0_6], %5 {strides = array<i32>} : memref<8x128xf32, #tpu.memory_space<vmem>>, vector<8x128xf32>,
    return
  }
  func.func @transform_0(%arg0: i32) -> (i32, i32) {
    %c0_i32 = arith.constant 0 : i32
    %c0_i32_0 = arith.constant 0 : i32
    return %arg0, %c0_i32 : i32, i32
  }
  func.func @transform_1(%arg0: i32) -> (i32, i32) {
    %c0_i32 = arith.constant 0 : i32
    %c0_i32_0 = arith.constant 0 : i32
    %c0_i32_1 = arith.constant 0 : i32
    return %c0_i32, %c0_i32_0 : i32, i32
  }
  func.func @transform_2(%arg0: i32) -> (i32, i32) {
    %c0_i32 = arith.constant 0 : i32
    %c0_i32_0 = arith.constant 0 : i32
    %c0_i32_1 = arith.constant 0 : i32
    return %c0_i32, %c0_i32_0 : i32, i32
  }
  func.func @transform_3(%arg0: i32) -> (i32, i32) {
    %c0_i32 = arith.constant 0 : i32
    %c0_i32_0 = arith.constant 0 : i32
    return %arg0, %c0_i32 : i32, i32
  }
}

module attributes {stable_mosaic.version = 11 : i64} {
  func.func @_fused_kernel(%arg0: i32, %arg1: memref<8x256xf32, #tpu.memory_space<vmem>>, %arg2: memref<256x128xf32, #tpu.memory_space<vmem>>, %arg3: memref<1x128xf32, #tpu.memory_space<vmem>>, %arg4: memref<8x128xf32, #tpu.memory_space<vmem>>) attributes {dimension_semantics = [#tpu.dimension_semantics<parallel>], iteration_bounds = array<i64: 1>, scalar_prefetch = 0 : i64, scratch_operands = 0 : i64, tpu.core_type = #tpu.core_type<tc>, window_params = [{transform_indices = @transform_0, window_bounds = array<i64: 8, 256>}, {pipeline_mode = #tpu.pipeline_mode<synchronous>, transform_indices = @transform_1, window_bounds = array<i64: 256, 128>}, {pipeline_mode = #tpu.pipeline_mode<synchronous>, transform_indices = @transform_2, window_bounds = array<i64: 1, 128>}, {transform_indices = @transform_3, window_bounds = array<i64: 8, 128>}]} {
    %c0 = arith.constant 0 : index
    %c0_0 = arith.constant 0 : index
    %0 = vector.load %arg1[%c0, %c0_0] : memref<8x256xf32, #tpu.memory_space<vmem>>, vector<8x256xf32>
    %c0_1 = arith.constant 0 : index
    %c0_2 = arith.constant 0 : index
    %1 = vector.load %arg2[%c0_1, %c0_2] : memref<256x128xf32, #tpu.memory_space<vmem>>, vector<256x128xf32>
    %cst = arith.constant dense<0.000000e+00> : vector<8x128xf32>
    %2 = tpu.matmul %0, %1, %cst {dimension_numbers = #tpu.dot_dimension_numbers<[1], [0], [0], [1], [0, 0, 1, 1], [], []>} : vector<8x256xf32>, vector<256x128xf32>, vector<8x128xf32> -> vector<8x128xf32>
    %c0_3 = arith.constant 0 : index
    %c0_4 = arith.constant 0 : index
    %3 = vector.load %arg3[%c0_3, %c0_4] : memref<1x128xf32, #tpu.memory_space<vmem>>, vector<1x128xf32>
    %4 = vector.broadcast %3 : vector<1x128xf32> to vector<8x128xf32>
    %5 = arith.addf %2, %4 : vector<8x128xf32>
    %c0_5 = arith.constant 0 : index
    %c0_6 = arith.constant 0 : index
    %6 = vector.load %arg4[%c0_5, %c0_6] : memref<8x128xf32, #tpu.memory_space<vmem>>, vector<8x128xf32>
    tpu.vector_store %arg4[%c0_5, %c0_6], %5 {strides = array<i32>} : memref<8x128xf32, #tpu.memory_space<vmem>>, vector<8x128xf32>,
    return
  }
  func.func @transform_0(%arg0: i32) -> (i32, i32) {
    %c0_i32 = arith.constant 0 : i32
    %c0_i32_0 = arith.constant 0 : i32
    return %arg0, %c0_i32 : i32, i32
  }
  func.func @transform_1(%arg0: i32) -> (i32, i32) {
    %c0_i32 = arith.constant 0 : i32
    %c0_i32_0 = arith.constant 0 : i32
    %c0_i32_1 = arith.constant 0 : i32
    return %c0_i32, %c0_i32_0 : i32, i32
  }
  func.func @transform_2(%arg0: i32) -> (i32, i32) {
    %c0_i32 = arith.constant 0 : i32
    %c0_i32_0 = arith.constant 0 : i32
    %c0_i32_1 = arith.constant 0 : i32
    return %c0_i32, %c0_i32_0 : i32, i32
  }
  func.func @transform_3(%arg0: i32) -> (i32, i32) {
    %c0_i32 = arith.constant 0 : i32
    %c0_i32_0 = arith.constant 0 : i32
    return %arg0, %c0_i32 : i32, i32
  }
}

</mosaic_0001>

<llo_original>
// kernel: tpu_custom_call.1
$region0: #{tpu_custom_call.1}
  #allocation0 [shape = 'u32[]', space=smem, size = 0x4, offset = 0x4, fixed_abs, tag = 'smem constant byte address 0x4 - core index']
  #allocation1 [shape = 'u32[144,128]{1,0:T(1,128)}', space=vmem, size = 0x12000, scoped, tag = 'internal scratch']
  %s0 = inlined_call_operand.hbm [shape: f32[8,256], index: 0, kind: input, shape index: {}]
  %s1 = inlined_call_operand.hbm [shape: f32[256,128], index: 1, kind: input, shape index: {}]
  %s2 = inlined_call_operand.vmem [shape: f32[1,128], index: 2, kind: input, shape index: {}]
  %s3 = inlined_call_operand.hbm [shape: f32[8,128], index: 3, kind: output, shape index: {}]
  %s4 = sld [smem:[#allocation0]]
  $region30: #{tpu_custom_call.1} parent=0
    _
  %s6 = ssub.s32 1, %s4
  %s7 = scalar_select 0, %s6, %s4
  $region1: #{tpu_custom_call.1} parent=0
    #allocation2 [shape = 'u8[8192]{0}', space=vmem, size = 0x2000, scoped, tag = 'input window, operand 0, single buffered']
    #allocation3 [shape = 's32[1]{0}', space=sflag, size = 0x4, scoped, tag = 'scoped memory for tpu_custom_call.1']
    #allocation4 [shape = 's32[1]{0}', space=sflag, size = 0x4, scoped, tag = 'scoped memory for tpu_custom_call.1']
    #allocation5 [shape = 'u8[131072]{0}', space=vmem, size = 0x20000, scoped, tag = 'input window, operand 1, single buffered']
    #allocation6 [shape = 's32[1]{0}', space=sflag, size = 0x4, scoped, tag = 'scoped memory for tpu_custom_call.1']
    #allocation7 [shape = 'u8[4096]{0}', space=vmem, size = 0x1000, scoped, tag = 'output window, operand 0, single buffered']
    %8 = vsyncpa [#allocation3], 0
    %9 = vsyncpa [#allocation6], 0
    %10 = vsyncpa [#allocation4], 0
    // Predicated region
    $region2: #{tpu_custom_call.1} parent=1 // pred_check
      _
    $region3: #{tpu_custom_call.1} parent=1 // pred_check_branch
      %12 = sbr.rel (0) target = $region5
    $region4: #{tpu_custom_call.1} parent=1 // pred_region
      %s14 = ssub.s32 256, 256
      %15 = vsyncadd [#allocation3], %s14
      %s17 = sshll.u32 [#allocation2], 4
      %s18 = int_to_ptr.vmem [resolvable:$true] %s17
      %20 = dma.hbm_to_vmem [thread:$0]  %s0, 256, %s18, [#allocation3]
    $region5: #{tpu_custom_call.1} parent=1 // pred_fallthru
      _
    // Predicated region
    $region6: #{tpu_custom_call.1} parent=1 // pred_check
      _
    $region7: #{tpu_custom_call.1} parent=1 // pred_check_branch
      %22 = sbr.rel (0) target = $region9
    $region8: #{tpu_custom_call.1} parent=1 // pred_region
      %s24 = ssub.s32 4096, 4096
      %25 = vsyncadd [#allocation6], %s24
      %s26 = sshll.u32 [#allocation5], 4
      %s27 = int_to_ptr.vmem [resolvable:$true] %s26
      %32 = dma.hbm_to_vmem [thread:$0]  %s1, 4096, %s27, [#allocation6], 128, 128, 8
    $region9: #{tpu_custom_call.1} parent=1 // pred_fallthru
      _
    // Predicated region
    $region10: #{tpu_custom_call.1} parent=1 // pred_check
      _
    $region11: #{tpu_custom_call.1} parent=1 // pred_check_branch
      %34 = sbr.rel (0) target = $region13
    $region12: #{tpu_custom_call.1} parent=1 // pred_region
      _
    $region13: #{tpu_custom_call.1} parent=1 // pred_fallthru
      _
    // Predicated region
    $region14: #{tpu_custom_call.1} parent=1 // pred_check
      _
    $region15: #{tpu_custom_call.1} parent=1 // pred_check_branch
      %36 = sbr.rel (0) target = $region17
    $region16: #{tpu_custom_call.1} parent=1 // pred_region
      %37 = dma.done [#allocation3], 256
    $region17: #{tpu_custom_call.1} parent=1 // pred_fallthru
      _
    // Predicated region
    $region18: #{tpu_custom_call.1} parent=1 // pred_check
      _
    $region19: #{tpu_custom_call.1} parent=1 // pred_check_branch
      %39 = sbr.rel (0) target = $region21
    $region20: #{tpu_custom_call.1} parent=1 // pred_region
      %40 = dma.done [#allocation6], 4096
    $region21: #{tpu_custom_call.1} parent=1 // pred_fallthru
      _
    %v41 = vld [vmem:[#allocation2] sm:$0xff]
    %v42 = vld [vmem:[#allocation2 + $0x8] sm:$0xff]
    %v43 = vld [vmem:[#allocation5] sm:$0xff]
    %v44 = vld [vmem:[#allocation5 + $0x8] sm:$0xff]
    %v45 = vld [vmem:[#allocation5 + $0x10] sm:$0xff]
    %v46 = vld [vmem:[#allocation5 + $0x18] sm:$0xff]
    %v47 = vld [vmem:[#allocation5 + $0x20] sm:$0xff]
    %v48 = vld [vmem:[#allocation5 + $0x28] sm:$0xff]
    %v49 = vld [vmem:[#allocation5 + $0x30] sm:$0xff]
    %v50 = vld [vmem:[#allocation5 + $0x38] sm:$0xff]
    %v51 = vld [vmem:[#allocation5 + $0x40] sm:$0xff]
    %v52 = vld [vmem:[#allocation5 + $0x48] sm:$0xff]
    %v53 = vld [vmem:[#allocation5 + $0x50] sm:$0xff]
    %v54 = vld [vmem:[#allocation5 + $0x58] sm:$0xff]
    %v55 = vld [vmem:[#allocation5 + $0x60] sm:$0xff]
    %v56 = vld [vmem:[#allocation5 + $0x68] sm:$0xff]
    %v57 = vld [vmem:[#allocation5 + $0x70] sm:$0xff]
    %v58 = vld [vmem:[#allocation5 + $0x78] sm:$0xff]
    %v59 = vld [vmem:[#allocation5 + $0x80] sm:$0xff]
    %v60 = vld [vmem:[#allocation5 + $0x88] sm:$0xff]
    %v61 = vld [vmem:[#allocation5 + $0x90] sm:$0xff]
    %v62 = vld [vmem:[#allocation5 + $0x98] sm:$0xff]
    %v63 = vld [vmem:[#allocation5 + $0xa0] sm:$0xff]
    %v64 = vld [vmem:[#allocation5 + $0xa8] sm:$0xff]
    %v65 = vld [vmem:[#allocation5 + $0xb0] sm:$0xff]
    %v66 = vld [vmem:[#allocation5 + $0xb8] sm:$0xff]
    %v67 = vld [vmem:[#allocation5 + $0xc0] sm:$0xff]
    %v68 = vld [vmem:[#allocation5 + $0xc8] sm:$0xff]
    %v69 = vld [vmem:[#allocation5 + $0xd0] sm:$0xff]
    %v70 = vld [vmem:[#allocation5 + $0xd8] sm:$0xff]
    %v71 = vld [vmem:[#allocation5 + $0xe0] sm:$0xff]
    %v72 = vld [vmem:[#allocation5 + $0xe8] sm:$0xff]
    %v73 = vld [vmem:[#allocation5 + $0xf0] sm:$0xff]
    %v74 = vld [vmem:[#allocation5 + $0xf8] sm:$0xff]
    %v75 = vld [vmem:[%s2] sm:$0x1]
    %v77 = vlaneseq
    %v78 = vshrl.u32 %v77, 7
    %v79 = vsub.s32 0, %v78
    %v80 = vrot.slane %v75, %v79
    %82 = vmatprep.subr.mxu0 0.0
    %83 = vmatpush1.msra.mxu0 %v43
    %84 = vmatprep.subr.mxu0 0.0
    %85 = vmatpush1.msra.mxu0 %v44
    %86 = vmatprep.subr.mxu0 0.0
    %87 = vmatpush1.msra.mxu0 %v45
    %88 = vmatprep.subr.mxu0 0.0
    %89 = vmatpush1.msra.mxu0 %v46
    %90 = vmatprep.subr.mxu0 0.0
    %91 = vmatpush1.msra.mxu0 %v47
    %92 = vmatprep.subr.mxu0 0.0
    %93 = vmatpush1.msra.mxu0 %v48
    %94 = vmatprep.subr.mxu0 0.0
    %95 = vmatpush1.msra.mxu0 %v49
    %96 = vmatprep.subr.mxu0 0.0
    %97 = vmatpush1.msra.mxu0 %v50
    %98 = vmatprep.subr.mxu0 0.0
    %99 = vmatpush1.msra.mxu0 %v51
    %100 = vmatprep.subr.mxu0 0.0
    %101 = vmatpush1.msra.mxu0 %v52
    %102 = vmatprep.subr.mxu0 0.0
    %103 = vmatpush1.msra.mxu0 %v53
    %104 = vmatprep.subr.mxu0 0.0
    %105 = vmatpush1.msra.mxu0 %v54
    %106 = vmatprep.subr.mxu0 0.0
    %107 = vmatpush1.msra.mxu0 %v55
    %108 = vmatprep.subr.mxu0 0.0
    %109 = vmatpush1.msra.mxu0 %v56
    %110 = vmatprep.subr.mxu0 0.0
    %111 = vmatpush1.msra.mxu0 %v57
    %112 = vmatprep.subr.mxu0 0.0
    %113 = vmatpush1.msra.mxu0 %v58
    %114 = vmatprep.subr.mxu0 0.0
    %115 = vmatpush1.msra.mxu0 %v59
    %116 = vmatprep.subr.mxu0 0.0
    %117 = vmatpush1.msra.mxu0 %v60
    %118 = vmatprep.subr.mxu0 0.0
    %119 = vmatpush1.msra.mxu0 %v61
    %120 = vmatprep.subr.mxu0 0.0
    %121 = vmatpush1.msra.mxu0 %v62
    %122 = vmatprep.subr.mxu0 0.0
    %123 = vmatpush1.msra.mxu0 %v63
    %124 = vmatprep.subr.mxu0 0.0
    %125 = vmatpush1.msra.mxu0 %v64
    %126 = vmatprep.subr.mxu0 0.0
    %127 = vmatpush1.msra.mxu0 %v65
    %128 = vmatprep.subr.mxu0 0.0
    %129 = vmatpush1.msra.mxu0 %v66
    %130 = vmatprep.subr.mxu0 0.0
    %131 = vmatpush1.msra.mxu0 %v67
    %132 = vmatprep.subr.mxu0 0.0
    %133 = vmatpush1.msra.mxu0 %v68
    %134 = vmatprep.subr.mxu0 0.0
    %135 = vmatpush1.msra.mxu0 %v69
    %136 = vmatprep.subr.mxu0 0.0
    %137 = vmatpush1.msra.mxu0 %v70
    %138 = vmatprep.subr.mxu0 0.0
    %139 = vmatpush1.msra.mxu0 %v71
    %140 = vmatprep.subr.mxu0 0.0
    %141 = vmatpush1.msra.mxu0 %v72
    %142 = vmatprep.subr.mxu0 0.0
    %143 = vmatpush1.msra.mxu0 %v73
    %144 = vmatprep.subr.mxu0 0.0
    %145 = vmatpush1.msra.mxu0 %v74
    %146 = vmatprep.mubr.f32.mxu0 %v42
    %147 = vmatmul.mubr.f32.gmra.mrb[0].mxu0 %v41
    %v148 = vpop.f32.mrb[0].mxu0
    %v149 = vadd.f32 %v80, %v148
    %v150 = vpop.f32.mrb[0].mxu0
    %151 = vdwg.mxu0
    %152 = vst [vmem:[#allocation7] sm:$0xff] %v149
    // Predicated region
    $region22: #{tpu_custom_call.1} parent=1 // pred_check
      _
    $region23: #{tpu_custom_call.1} parent=1 // pred_check_branch
      %154 = sbr.rel (0) target = $region25
    $region24: #{tpu_custom_call.1} parent=1 // pred_region
      %s156 = ssub.s32 128, 128
      %157 = vsyncadd [#allocation4], %s156
      %s159 = sshll.u32 [#allocation7], 4
      %s160 = int_to_ptr.vmem [resolvable:$true] %s159
      %162 = dma.vmem_to_hbm [thread:$0]  %s160, 128, %s3, [#allocation4]
    $region25: #{tpu_custom_call.1} parent=1 // pred_fallthru
      _
    // Predicated region
    $region26: #{tpu_custom_call.1} parent=1 // pred_check
      _
    $region27: #{tpu_custom_call.1} parent=1 // pred_check_branch
      %164 = sbr.rel (0) target = $region29
    $region28: #{tpu_custom_call.1} parent=1 // pred_region
      %165 = dma.done [#allocation4], 128
    $region29: #{tpu_custom_call.1} parent=1 // pred_fallthru
      _
    %166 = vsyncpa [#allocation3], 1
    %167 = vsyncpa [#allocation6], 1
    %168 = vsyncpa [#allocation4], 1

// kernel: tpu_custom_call.1
$region0: #{tpu_custom_call.1}
  #allocation0 [shape = 'u32[]', space=smem, size = 0x4, offset = 0x4, fixed_abs, tag = 'smem constant byte address 0x4 - core index']
  #allocation1 [shape = 'u32[144,128]{1,0:T(1,128)}', space=vmem, size = 0x12000, scoped, tag = 'internal scratch']
  %s0 = inlined_call_operand.hbm [shape: f32[8,256], index: 0, kind: input, shape index: {}]
  %s1 = inlined_call_operand.hbm [shape: f32[256,128], index: 1, kind: input, shape index: {}]
  %s2 = inlined_call_operand.vmem [shape: f32[1,128], index: 2, kind: input, shape index: {}]
  %s3 = inlined_call_operand.hbm [shape: f32[8,128], index: 3, kind: output, shape index: {}]
  %s4 = sld [smem:[#allocation0]]
  $region30: #{tpu_custom_call.1} parent=0
    _
  %s6 = ssub.s32 1, %s4
  %s7 = scalar_select 0, %s6, %s4
  $region1: #{tpu_custom_call.1} parent=0
    #allocation2 [shape = 'u8[8192]{0}', space=vmem, size = 0x2000, scoped, tag = 'input window, operand 0, single buffered']
    #allocation3 [shape = 's32[1]{0}', space=sflag, size = 0x4, scoped, tag = 'scoped memory for tpu_custom_call.1']
    #allocation4 [shape = 's32[1]{0}', space=sflag, size = 0x4, scoped, tag = 'scoped memory for tpu_custom_call.1']
    #allocation5 [shape = 'u8[131072]{0}', space=vmem, size = 0x20000, scoped, tag = 'input window, operand 1, single buffered']
    #allocation6 [shape = 's32[1]{0}', space=sflag, size = 0x4, scoped, tag = 'scoped memory for tpu_custom_call.1']
    #allocation7 [shape = 'u8[4096]{0}', space=vmem, size = 0x1000, scoped, tag = 'output window, operand 0, single buffered']
    %8 = vsyncpa [#allocation3], 0
    %9 = vsyncpa [#allocation6], 0
    %10 = vsyncpa [#allocation4], 0
    // Predicated region
    $region2: #{tpu_custom_call.1} parent=1 // pred_check
      _
    $region3: #{tpu_custom_call.1} parent=1 // pred_check_branch
      %12 = sbr.rel (0) target = $region5
    $region4: #{tpu_custom_call.1} parent=1 // pred_region
      %s14 = ssub.s32 256, 256
      %15 = vsyncadd [#allocation3], %s14
      %s17 = sshll.u32 [#allocation2], 4
      %s18 = int_to_ptr.vmem [resolvable:$true] %s17
      %20 = dma.hbm_to_vmem [thread:$0]  %s0, 256, %s18, [#allocation3]
    $region5: #{tpu_custom_call.1} parent=1 // pred_fallthru
      _
    // Predicated region
    $region6: #{tpu_custom_call.1} parent=1 // pred_check
      _
    $region7: #{tpu_custom_call.1} parent=1 // pred_check_branch
      %22 = sbr.rel (0) target = $region9
    $region8: #{tpu_custom_call.1} parent=1 // pred_region
      %s24 = ssub.s32 4096, 4096
      %25 = vsyncadd [#allocation6], %s24
      %s26 = sshll.u32 [#allocation5], 4
      %s27 = int_to_ptr.vmem [resolvable:$true] %s26
      %32 = dma.hbm_to_vmem [thread:$0]  %s1, 4096, %s27, [#allocation6], 128, 128, 8
    $region9: #{tpu_custom_call.1} parent=1 // pred_fallthru
      _
    // Predicated region
    $region10: #{tpu_custom_call.1} parent=1 // pred_check
      _
    $region11: #{tpu_custom_call.1} parent=1 // pred_check_branch
      %34 = sbr.rel (0) target = $region13
    $region12: #{tpu_custom_call.1} parent=1 // pred_region
      _
    $region13: #{tpu_custom_call.1} parent=1 // pred_fallthru
      _
    // Predicated region
    $region14: #{tpu_custom_call.1} parent=1 // pred_check
      _
    $region15: #{tpu_custom_call.1} parent=1 // pred_check_branch
      %36 = sbr.rel (0) target = $region17
    $region16: #{tpu_custom_call.1} parent=1 // pred_region
      %37 = dma.done [#allocation3], 256
    $region17: #{tpu_custom_call.1} parent=1 // pred_fallthru
      _
    // Predicated region
    $region18: #{tpu_custom_call.1} parent=1 // pred_check
      _
    $region19: #{tpu_custom_call.1} parent=1 // pred_check_branch
      %39 = sbr.rel (0) target = $region21
    $region20: #{tpu_custom_call.1} parent=1 // pred_region
      %40 = dma.done [#allocation6], 4096
    $region21: #{tpu_custom_call.1} parent=1 // pred_fallthru
      _
    %v41 = vld [vmem:[#allocation2] sm:$0xff]
    %v42 = vld [vmem:[#allocation2 + $0x8] sm:$0xff]
    %v43 = vld [vmem:[#allocation5] sm:$0xff]
    %v44 = vld [vmem:[#allocation5 + $0x8] sm:$0xff]
    %v45 = vld [vmem:[#allocation5 + $0x10] sm:$0xff]
    %v46 = vld [vmem:[#allocation5 + $0x18] sm:$0xff]
    %v47 = vld [vmem:[#allocation5 + $0x20] sm:$0xff]
    %v48 = vld [vmem:[#allocation5 + $0x28] sm:$0xff]
    %v49 = vld [vmem:[#allocation5 + $0x30] sm:$0xff]
    %v50 = vld [vmem:[#allocation5 + $0x38] sm:$0xff]
    %v51 = vld [vmem:[#allocation5 + $0x40] sm:$0xff]
    %v52 = vld [vmem:[#allocation5 + $0x48] sm:$0xff]
    %v53 = vld [vmem:[#allocation5 + $0x50] sm:$0xff]
    %v54 = vld [vmem:[#allocation5 + $0x58] sm:$0xff]
    %v55 = vld [vmem:[#allocation5 + $0x60] sm:$0xff]
    %v56 = vld [vmem:[#allocation5 + $0x68] sm:$0xff]
    %v57 = vld [vmem:[#allocation5 + $0x70] sm:$0xff]
    %v58 = vld [vmem:[#allocation5 + $0x78] sm:$0xff]
    %v59 = vld [vmem:[#allocation5 + $0x80] sm:$0xff]
    %v60 = vld [vmem:[#allocation5 + $0x88] sm:$0xff]
    %v61 = vld [vmem:[#allocation5 + $0x90] sm:$0xff]
    %v62 = vld [vmem:[#allocation5 + $0x98] sm:$0xff]
    %v63 = vld [vmem:[#allocation5 + $0xa0] sm:$0xff]
    %v64 = vld [vmem:[#allocation5 + $0xa8] sm:$0xff]
    %v65 = vld [vmem:[#allocation5 + $0xb0] sm:$0xff]
    %v66 = vld [vmem:[#allocation5 + $0xb8] sm:$0xff]
    %v67 = vld [vmem:[#allocation5 + $0xc0] sm:$0xff]
    %v68 = vld [vmem:[#allocation5 + $0xc8] sm:$0xff]
    %v69 = vld [vmem:[#allocation5 + $0xd0] sm:$0xff]
    %v70 = vld [vmem:[#allocation5 + $0xd8] sm:$0xff]
    %v71 = vld [vmem:[#allocation5 + $0xe0] sm:$0xff]
    %v72 = vld [vmem:[#allocation5 + $0xe8] sm:$0xff]
    %v73 = vld [vmem:[#allocation5 + $0xf0] sm:$0xff]
    %v74 = vld [vmem:[#allocation5 + $0xf8] sm:$0xff]
    %v75 = vld [vmem:[%s2] sm:$0x1]
    %v77 = vlaneseq
    %v78 = vshrl.u32 %v77, 7
    %v79 = vsub.s32 0, %v78
    %v80 = vrot.slane %v75, %v79
    %82 = vmatprep.subr.mxu0 0.0
    %83 = vmatpush1.msra.mxu0 %v43
    %84 = vmatprep.subr.mxu0 0.0
    %85 = vmatpush1.msra.mxu0 %v44
    %86 = vmatprep.subr.mxu0 0.0
    %87 = vmatpush1.msra.mxu0 %v45
    %88 = vmatprep.subr.mxu0 0.0
    %89 = vmatpush1.msra.mxu0 %v46
    %90 = vmatprep.subr.mxu0 0.0
    %91 = vmatpush1.msra.mxu0 %v47
    %92 = vmatprep.subr.mxu0 0.0
    %93 = vmatpush1.msra.mxu0 %v48
    %94 = vmatprep.subr.mxu0 0.0
    %95 = vmatpush1.msra.mxu0 %v49
    %96 = vmatprep.subr.mxu0 0.0
    %97 = vmatpush1.msra.mxu0 %v50
    %98 = vmatprep.subr.mxu0 0.0
    %99 = vmatpush1.msra.mxu0 %v51
    %100 = vmatprep.subr.mxu0 0.0
    %101 = vmatpush1.msra.mxu0 %v52
    %102 = vmatprep.subr.mxu0 0.0
    %103 = vmatpush1.msra.mxu0 %v53
    %104 = vmatprep.subr.mxu0 0.0
    %105 = vmatpush1.msra.mxu0 %v54
    %106 = vmatprep.subr.mxu0 0.0
    %107 = vmatpush1.msra.mxu0 %v55
    %108 = vmatprep.subr.mxu0 0.0
    %109 = vmatpush1.msra.mxu0 %v56
    %110 = vmatprep.subr.mxu0 0.0
    %111 = vmatpush1.msra.mxu0 %v57
    %112 = vmatprep.subr.mxu0 0.0
    %113 = vmatpush1.msra.mxu0 %v58
    %114 = vmatprep.subr.mxu0 0.0
    %115 = vmatpush1.msra.mxu0 %v59
    %116 = vmatprep.subr.mxu0 0.0
    %117 = vmatpush1.msra.mxu0 %v60
    %118 = vmatprep.subr.mxu0 0.0
    %119 = vmatpush1.msra.mxu0 %v61
    %120 = vmatprep.subr.mxu0 0.0
    %121 = vmatpush1.msra.mxu0 %v62
    %122 = vmatprep.subr.mxu0 0.0
    %123 = vmatpush1.msra.mxu0 %v63
    %124 = vmatprep.subr.mxu0 0.0
    %125 = vmatpush1.msra.mxu0 %v64
    %126 = vmatprep.subr.mxu0 0.0
    %127 = vmatpush1.msra.mxu0 %v65
    %128 = vmatprep.subr.mxu0 0.0
    %129 = vmatpush1.msra.mxu0 %v66
    %130 = vmatprep.subr.mxu0 0.0
    %131 = vmatpush1.msra.mxu0 %v67
    %132 = vmatprep.subr.mxu0 0.0
    %133 = vmatpush1.msra.mxu0 %v68
    %134 = vmatprep.subr.mxu0 0.0
    %135 = vmatpush1.msra.mxu0 %v69
    %136 = vmatprep.subr.mxu0 0.0
    %137 = vmatpush1.msra.mxu0 %v70
    %138 = vmatprep.subr.mxu0 0.0
    %139 = vmatpush1.msra.mxu0 %v71
    %140 = vmatprep.subr.mxu0 0.0
    %141 = vmatpush1.msra.mxu0 %v72
    %142 = vmatprep.subr.mxu0 0.0
    %143 = vmatpush1.msra.mxu0 %v73
    %144 = vmatprep.subr.mxu0 0.0
    %145 = vmatpush1.msra.mxu0 %v74
    %146 = vmatprep.mubr.f32.mxu0 %v42
    %147 = vmatmul.mubr.f32.gmra.mrb[0].mxu0 %v41
    %v148 = vpop.f32.mrb[0].mxu0
    %v149 = vadd.f32 %v80, %v148
    %v150 = vpop.f32.mrb[0].mxu0
    %151 = vdwg.mxu0
    %152 = vst [vmem:[#allocation7] sm:$0xff] %v149
    // Predicated region
    $region22: #{tpu_custom_call.1} parent=1 // pred_check
      _
    $region23: #{tpu_custom_call.1} parent=1 // pred_check_branch
      %154 = sbr.rel (0) target = $region25
    $region24: #{tpu_custom_call.1} parent=1 // pred_region
      %s156 = ssub.s32 128, 128
      %157 = vsyncadd [#allocation4], %s156
      %s159 = sshll.u32 [#allocation7], 4
      %s160 = int_to_ptr.vmem [resolvable:$true] %s159
      %162 = dma.vmem_to_hbm [thread:$0]  %s160, 128, %s3, [#allocation4]
    $region25: #{tpu_custom_call.1} parent=1 // pred_fallthru
      _
    // Predicated region
    $region26: #{tpu_custom_call.1} parent=1 // pred_check
      _
    $region27: #{tpu_custom_call.1} parent=1 // pred_check_branch
      %164 = sbr.rel (0) target = $region29
    $region28: #{tpu_custom_call.1} parent=1 // pred_region
      %165 = dma.done [#allocation4], 128
    $region29: #{tpu_custom_call.1} parent=1 // pred_fallthru
      _
    %166 = vsyncpa [#allocation3], 1
    %167 = vsyncpa [#allocation6], 1
    %168 = vsyncpa [#allocation4], 1

</llo_original>
